<compile_context>
chip_gen: v6e
topology: v6e:2x2x1
jax: 0.10.0
libtpu: 0.0.40
codegen_flags: <defaults>
</compile_context>

<pallas_src>
import jax
import jax.numpy as jnp
from jax.experimental import pallas as pl
from jax.experimental.pallas import tpu as pltpu


def _round_up(x, m):
    return (x + m - 1) // m * m


def reinforce_kernel(x_ref, w1_ref, b1_ref, w2_ref, b2_ref,
                     w3_ref, b3_ref, w4_ref, b4_ref, out_ref):
    x = x_ref[...]                                     # (tile_b, in) bf16

    h = jnp.dot(x, w1_ref[...], preferred_element_type=jnp.float32) + b1_ref[...]
    h = jnp.maximum(h, 0.0).astype(jnp.bfloat16)

    h = jnp.dot(h, w2_ref[...], preferred_element_type=jnp.float32) + b2_ref[...]
    h = jnp.maximum(h, 0.0).astype(jnp.bfloat16)

    h = jnp.dot(h, w3_ref[...], preferred_element_type=jnp.float32) + b3_ref[...]
    h = jnp.maximum(h, 0.0).astype(jnp.bfloat16)

    logits = jnp.dot(h, w4_ref[...], preferred_element_type=jnp.float32) + b4_ref[...]

    # Softmax along dim=1. The module's global-max shift is softmax-shift-
    # invariant dead work; the per-row max shift below is all that matters.
    shifted = logits - jnp.max(logits, axis=1, keepdims=True)
    e = jnp.exp(shifted)
    inv = pl.reciprocal(jnp.sum(e, axis=1, keepdims=True))   # exact EUP recip
    out_ref[...] = e * inv


def prepare_params(params):
    """One-time parameter preprocessing (hoisted out of the per-call path).

    Returns (prepped_params, out_size). prepped_params are device-committed:
      w1,w2 bf16; w3 bf16 column-padded 32->128; w4 bf16 row-padded to 128 and
      lane-padded to 128 outputs; b1,b2 f32; b3 f32 zero-padded; b4 f32 padded
      with -1e30 on unused lanes (-> probability exactly 0).
    """
    w1, b1, w2, b2, w3, b3, w4, b4 = params
    out_size = w4.shape[1]
    h3 = w3.shape[1]
    h3p = _round_up(max(h3, 128), 128)
    out_pad = _round_up(max(out_size, 128), 128)

    w1b = w1.astype(jnp.bfloat16)
    w2b = w2.astype(jnp.bfloat16)

    w3p = jnp.zeros((w3.shape[0], h3p), jnp.bfloat16)
    w3p = w3p.at[:, :h3].set(w3.astype(jnp.bfloat16))
    b3p = jnp.zeros((1, h3p), jnp.float32)
    b3p = b3p.at[:, :h3].set(b3.astype(jnp.float32))

    w4p = jnp.zeros((h3p, out_pad), jnp.bfloat16)
    w4p = w4p.at[:h3, :out_size].set(w4.astype(jnp.bfloat16))
    b4p = jnp.full((1, out_pad), -1e30, jnp.float32)
    b4p = b4p.at[:, :out_size].set(b4.astype(jnp.float32))

    prepped = (w1b, b1.astype(jnp.float32), w2b, b2.astype(jnp.float32),
               w3p, b3p, w4p, b4p)
    prepped = tuple(jax.device_put(jax.block_until_ready(p)) for p in prepped)
    return prepped, out_size


def _choose_tile_b(batch, cap=512):
    """Divisor-aware batch tile: multiple of 8 (16 when large), <= cap,
    minimizing padding; >=2 grid steps for batches >=32 so the 'parallel'
    axis can shard across v7x's two TensorCores."""
    pb = _round_up(batch, 8)
    if pb <= cap:
        if pb >= 32 and (pb // 2) % 8 == 0:
            return pb // 2
        return pb
    best_t, best_pad = cap, None
    for t in range(cap, 15, -16):
        pad = _round_up(batch, t) - batch
        if best_pad is None or pad < best_pad:
            best_t, best_pad = t, pad
            if pad == 0:
                break
    return best_t


def reinforce_forward(x, prepped, out_size, *, tile_b=None):
    """Per-call path: cast/pad x, run the kernel, slice the result."""
    w1b, b1, w2b, b2, w3p, b3p, w4p, b4p = prepped
    batch, in_size = x.shape
    h1, h2 = w1b.shape[1], w2b.shape[1]
    h3p, out_pad = w4p.shape

    xb = x.astype(jnp.bfloat16)
    if tile_b is None:
        tile_b = _choose_tile_b(batch)
    padded_batch = _round_up(batch, tile_b)
    if padded_batch != batch:
        xb = jnp.pad(xb, ((0, padded_batch - batch), (0, 0)))
    grid = (padded_batch // tile_b,)

    const = lambda i: (0, 0)
    flops = 2 * padded_batch * (in_size * h1 + h1 * h2 + h2 * h3p + h3p * out_pad)
    bytes_accessed = (
        xb.size * 2
        + (w1b.size + w2b.size + w3p.size + w4p.size) * 2
        + (b1.size + b2.size + b3p.size + b4p.size) * 4
        + padded_batch * out_pad * 4)

    out = pl.pallas_call(
        reinforce_kernel,
        out_shape=jax.ShapeDtypeStruct((padded_batch, out_pad), jnp.float32),
        grid=grid,
        in_specs=[
            pl.BlockSpec((tile_b, in_size), lambda i: (i, 0)),   # x: tiled over batch
            pl.BlockSpec((in_size, h1), const),                  # weights/biases:
            pl.BlockSpec((1, h1), const),                        #   resident in VMEM
            pl.BlockSpec((h1, h2), const),
            pl.BlockSpec((1, h2), const),
            pl.BlockSpec((h2, h3p), const),
            pl.BlockSpec((1, h3p), const),
            pl.BlockSpec((h3p, out_pad), const),
            pl.BlockSpec((1, out_pad), const),
        ],
        out_specs=pl.BlockSpec((tile_b, out_pad), lambda i: (i, 0)),
        compiler_params=pltpu.CompilerParams(
            dimension_semantics=("parallel",),
            vmem_limit_bytes=32 * 1024 * 1024),
        cost_estimate=pl.CostEstimate(
            flops=flops,
            transcendentals=padded_batch * (out_pad + 1),
            bytes_accessed=bytes_accessed),
    )(xb, w1b, b1, w2b, b2, w3p, b3p, w4p, b4p)

    return out[:batch, :out_size]


def reference_forward(x, params):
    """Pure-JAX f32 reference matching the PyTorch forward."""
    w1, b1, w2, b2, w3, b3, w4, b4 = params
    h = jax.nn.relu(x @ w1 + b1)
    h = jax.nn.relu(h @ w2 + b2)
    h = jax.nn.relu(h @ w3 + b3)
    logits = h @ w4 + b4
    logits = logits - jnp.max(logits)           # global max, as in the module
    return jax.nn.softmax(logits, axis=1)


def init_params(key, input_size, output_size):
    """Deterministic init matching the PyTorch module's scheme:
    kaiming_normal (fan_in, relu gain) for fc1-3 weights, xavier_normal for
    fc4, PyTorch-default uniform(-1/sqrt(fan_in), 1/sqrt(fan_in)) for biases.
    Weights are stored pre-transposed as (in, out) == PyTorch weight.T."""
    sizes = [(input_size, 512), (512, 128), (128, 32), (32, output_size)]
    keys = jax.random.split(key, 8)
    params = []
    for i, (fan_in, fan_out) in enumerate(sizes):
        if i < 3:
            std = (2.0 / fan_in) ** 0.5               # kaiming_normal_, relu
        else:
            std = (2.0 / (fan_in + fan_out)) ** 0.5   # xavier_normal_
        w = std * jax.random.normal(keys[2 * i], (fan_in, fan_out), jnp.float32)
        bound = 1.0 / (fan_in ** 0.5)
        b = jax.random.uniform(keys[2 * i + 1], (1, fan_out), jnp.float32,
                               minval=-bound, maxval=bound)
        params.extend([w, b])
    return tuple(params)


if __name__ == "__main__":
    key = jax.random.PRNGKey(0)
    k_param, k_x = jax.random.split(key)

    batch, input_size, output_size = 8, 12, 2
    params = init_params(k_param, input_size, output_size)
    x = jax.random.normal(k_x, (batch, input_size), jnp.float32)

    # One-time parameter preparation (hoisted out of the per-call path).
    prepped, out_size = prepare_params(params)

    out = jax.block_until_ready(reinforce_forward(x, prepped, out_size))

    assert out.shape == (batch, output_size)
    assert bool(jnp.all(jnp.isfinite(out)))
    # softmax rows sum to 1 (exact reciprocal; only bf16 matmul error remains)
    assert jnp.allclose(jnp.sum(out, axis=1), 1.0, atol=2e-3)
    # loose match vs the f32 reference (bf16 weights/activations in kernel)
    ref = reference_forward(x, params)
    assert jnp.allclose(out, ref, atol=8e-2)

    # Also exercise a larger / awkward batch (multi-step grid, padding path).
    xb2 = jax.random.normal(jax.random.PRNGKey(1), (200, input_size), jnp.float32)
    out2 = jax.block_until_ready(reinforce_forward(xb2, prepped, out_size))
    ref2 = reference_forward(xb2, params)
    assert out2.shape == (200, output_size)
    assert jnp.allclose(jnp.sum(out2, axis=1), 1.0, atol=2e-3)
    assert jnp.allclose(out2, ref2, atol=8e-2)

    print("KERNEL_OK")
</pallas_src>

<mosaic_0001>
module attributes {stable_mosaic.version = 11 : i64} {
  func.func @reinforce_kernel(%arg0: i32, %arg1: memref<8x12xbf16, #tpu.memory_space<vmem>>, %arg2: memref<12x512xbf16, #tpu.memory_space<vmem>>, %arg3: memref<1x512xf32, #tpu.memory_space<vmem>>, %arg4: memref<512x128xbf16, #tpu.memory_space<vmem>>, %arg5: memref<1x128xf32, #tpu.memory_space<vmem>>, %arg6: memref<128x128xbf16, #tpu.memory_space<vmem>>, %arg7: memref<1x128xf32, #tpu.memory_space<vmem>>, %arg8: memref<128x128xbf16, #tpu.memory_space<vmem>>, %arg9: memref<1x128xf32, #tpu.memory_space<vmem>>, %arg10: memref<8x128xf32, #tpu.memory_space<vmem>>) attributes {dimension_semantics = [#tpu.dimension_semantics<parallel>], iteration_bounds = array<i64: 1>, scalar_prefetch = 0 : i64, scratch_operands = 0 : i64, tpu.core_type = #tpu.core_type<tc>, window_params = [{transform_indices = @transform_0, window_bounds = array<i64: 8, 12>}, {pipeline_mode = #tpu.pipeline_mode<synchronous>, transform_indices = @transform_1, window_bounds = array<i64: 12, 512>}, {pipeline_mode = #tpu.pipeline_mode<synchronous>, transform_indices = @transform_2, window_bounds = array<i64: 1, 512>}, {pipeline_mode = #tpu.pipeline_mode<synchronous>, transform_indices = @transform_3, window_bounds = array<i64: 512, 128>}, {pipeline_mode = #tpu.pipeline_mode<synchronous>, transform_indices = @transform_4, window_bounds = array<i64: 1, 128>}, {pipeline_mode = #tpu.pipeline_mode<synchronous>, transform_indices = @transform_5, window_bounds = array<i64: 128, 128>}, {pipeline_mode = #tpu.pipeline_mode<synchronous>, transform_indices = @transform_6, window_bounds = array<i64: 1, 128>}, {pipeline_mode = #tpu.pipeline_mode<synchronous>, transform_indices = @transform_7, window_bounds = array<i64: 128, 128>}, {pipeline_mode = #tpu.pipeline_mode<synchronous>, transform_indices = @transform_8, window_bounds = array<i64: 1, 128>}, {transform_indices = @transform_9, window_bounds = array<i64: 8, 128>}]} {
    %c0 = arith.constant 0 : index
    %c0_0 = arith.constant 0 : index
    %0 = vector.load %arg1[%c0, %c0_0] : memref<8x12xbf16, #tpu.memory_space<vmem>>, vector<8x12xbf16>
    %c0_1 = arith.constant 0 : index
    %c0_2 = arith.constant 0 : index
    %1 = vector.load %arg2[%c0_1, %c0_2] : memref<12x512xbf16, #tpu.memory_space<vmem>>, vector<12x512xbf16>
    %cst = arith.constant dense<0.000000e+00> : vector<8x512xf32>
    %2 = tpu.matmul %0, %1, %cst {dimension_numbers = #tpu.dot_dimension_numbers<[1], [0], [0], [1], [0, 0, 1, 1], [], []>} : vector<8x12xbf16>, vector<12x512xbf16>, vector<8x512xf32> -> vector<8x512xf32>
    %c0_3 = arith.constant 0 : index
    %c0_4 = arith.constant 0 : index
    %3 = vector.load %arg3[%c0_3, %c0_4] : memref<1x512xf32, #tpu.memory_space<vmem>>, vector<1x512xf32>
    %4 = vector.broadcast %3 : vector<1x512xf32> to vector<8x512xf32>
    %5 = arith.addf %2, %4 : vector<8x512xf32>
    %cst_5 = arith.constant 0.000000e+00 : f32
    %6 = vector.broadcast %cst_5 : f32 to vector<8x512xf32>
    %7 = arith.maximumf %5, %6 : vector<8x512xf32>
    %8 = arith.truncf %7 : vector<8x512xf32> to vector<8x512xbf16>
    %c0_6 = arith.constant 0 : index
    %c0_7 = arith.constant 0 : index
    %9 = vector.load %arg4[%c0_6, %c0_7] : memref<512x128xbf16, #tpu.memory_space<vmem>>, vector<512x128xbf16>
    %cst_8 = arith.constant dense<0.000000e+00> : vector<8x128xf32>
    %10 = tpu.matmul %8, %9, %cst_8 {dimension_numbers = #tpu.dot_dimension_numbers<[1], [0], [0], [1], [0, 0, 1, 1], [], []>} : vector<8x512xbf16>, vector<512x128xbf16>, vector<8x128xf32> -> vector<8x128xf32>
    %c0_9 = arith.constant 0 : index
    %c0_10 = arith.constant 0 : index
    %11 = vector.load %arg5[%c0_9, %c0_10] : memref<1x128xf32, #tpu.memory_space<vmem>>, vector<1x128xf32>
    %12 = vector.broadcast %11 : vector<1x128xf32> to vector<8x128xf32>
    %13 = arith.addf %10, %12 : vector<8x128xf32>
    %cst_11 = arith.constant 0.000000e+00 : f32
    %14 = vector.broadcast %cst_11 : f32 to vector<8x128xf32>
    %15 = arith.maximumf %13, %14 : vector<8x128xf32>
    %16 = arith.truncf %15 : vector<8x128xf32> to vector<8x128xbf16>
    %c0_12 = arith.constant 0 : index
    %c0_13 = arith.constant 0 : index
    %17 = vector.load %arg6[%c0_12, %c0_13] : memref<128x128xbf16, #tpu.memory_space<vmem>>, vector<128x128xbf16>
    %cst_14 = arith.constant dense<0.000000e+00> : vector<8x128xf32>
    %18 = tpu.matmul %16, %17, %cst_14 {dimension_numbers = #tpu.dot_dimension_numbers<[1], [0], [0], [1], [0, 0, 1, 1], [], []>} : vector<8x128xbf16>, vector<128x128xbf16>, vector<8x128xf32> -> vector<8x128xf32>
    %c0_15 = arith.constant 0 : index
    %c0_16 = arith.constant 0 : index
    %19 = vector.load %arg7[%c0_15, %c0_16] : memref<1x128xf32, #tpu.memory_space<vmem>>, vector<1x128xf32>
    %20 = vector.broadcast %19 : vector<1x128xf32> to vector<8x128xf32>
    %21 = arith.addf %18, %20 : vector<8x128xf32>
    %cst_17 = arith.constant 0.000000e+00 : f32
    %22 = vector.broadcast %cst_17 : f32 to vector<8x128xf32>
    %23 = arith.maximumf %21, %22 : vector<8x128xf32>
    %24 = arith.truncf %23 : vector<8x128xf32> to vector<8x128xbf16>
    %c0_18 = arith.constant 0 : index
    %c0_19 = arith.constant 0 : index
    %25 = vector.load %arg8[%c0_18, %c0_19] : memref<128x128xbf16, #tpu.memory_space<vmem>>, vector<128x128xbf16>
    %cst_20 = arith.constant dense<0.000000e+00> : vector<8x128xf32>
    %26 = tpu.matmul %24, %25, %cst_20 {dimension_numbers = #tpu.dot_dimension_numbers<[1], [0], [0], [1], [0, 0, 1, 1], [], []>} : vector<8x128xbf16>, vector<128x128xbf16>, vector<8x128xf32> -> vector<8x128xf32>
    %c0_21 = arith.constant 0 : index
    %c0_22 = arith.constant 0 : index
    %27 = vector.load %arg9[%c0_21, %c0_22] : memref<1x128xf32, #tpu.memory_space<vmem>>, vector<1x128xf32>
    %28 = vector.broadcast %27 : vector<1x128xf32> to vector<8x128xf32>
    %29 = arith.addf %26, %28 : vector<8x128xf32>
    %cst_23 = arith.constant dense<0xFF800000> : vector<8xf32>
    %30 = vector.multi_reduction <maximumf>, %29, %cst_23 [1] : vector<8x128xf32> to vector<8xf32>
    %31 = vector.shape_cast %30 : vector<8xf32> to vector<8x1xf32>
    %32 = vector.broadcast %31 : vector<8x1xf32> to vector<8x128xf32>
    %33 = arith.subf %29, %32 : vector<8x128xf32>
    %34 = math.exp %33 : vector<8x128xf32>
    %cst_24 = arith.constant dense<0.000000e+00> : vector<8xf32>
    %35 = vector.multi_reduction <add>, %34, %cst_24 [1] : vector<8x128xf32> to vector<8xf32>
    %36 = vector.shape_cast %35 : vector<8xf32> to vector<8x1xf32>
    %37 = tpu.reciprocal %36 : vector<8x1xf32> -> vector<8x1xf32>
    %38 = vector.broadcast %37 : vector<8x1xf32> to vector<8x128xf32>
    %39 = arith.mulf %34, %38 : vector<8x128xf32>
    %c0_25 = arith.constant 0 : index
    %c0_26 = arith.constant 0 : index
    %40 = vector.load %arg10[%c0_25, %c0_26] : memref<8x128xf32, #tpu.memory_space<vmem>>, vector<8x128xf32>
    tpu.vector_store %arg10[%c0_25, %c0_26], %39 {strides = array<i32>} : memref<8x128xf32, #tpu.memory_space<vmem>>, vector<8x128xf32>,
    return
  }
  func.func @transform_0(%arg0: i32) -> (i32, i32) {
    %c0_i32 = arith.constant 0 : i32
    %c0_i32_0 = arith.constant 0 : i32
    return %arg0, %c0_i32 : i32, i32
  }
  func.func @transform_1(%arg0: i32) -> (i32, i32) {
    %c0_i32 = arith.constant 0 : i32
    %c0_i32_0 = arith.constant 0 : i32
    %c0_i32_1 = arith.constant 0 : i32
    return %c0_i32, %c0_i32_0 : i32, i32
  }
  func.func @transform_2(%arg0: i32) -> (i32, i32) {
    %c0_i32 = arith.constant 0 : i32
    %c0_i32_0 = arith.constant 0 : i32
    %c0_i32_1 = arith.constant 0 : i32
    return %c0_i32, %c0_i32_0 : i32, i32
  }
  func.func @transform_3(%arg0: i32) -> (i32, i32) {
    %c0_i32 = arith.constant 0 : i32
    %c0_i32_0 = arith.constant 0 : i32
    %c0_i32_1 = arith.constant 0 : i32
    return %c0_i32, %c0_i32_0 : i32, i32
  }
  func.func @transform_4(%arg0: i32) -> (i32, i32) {
    %c0_i32 = arith.constant 0 : i32
    %c0_i32_0 = arith.constant 0 : i32
    %c0_i32_1 = arith.constant 0 : i32
    return %c0_i32, %c0_i32_0 : i32, i32
  }
  func.func @transform_5(%arg0: i32) -> (i32, i32) {
    %c0_i32 = arith.constant 0 : i32
    %c0_i32_0 = arith.constant 0 : i32
    %c0_i32_1 = arith.constant 0 : i32
    return %c0_i32, %c0_i32_0 : i32, i32
  }
  func.func @transform_6(%arg0: i32) -> (i32, i32) {
    %c0_i32 = arith.constant 0 : i32
    %c0_i32_0 = arith.constant 0 : i32
    %c0_i32_1 = arith.constant 0 : i32
    return %c0_i32, %c0_i32_0 : i32, i32
  }
  func.func @transform_7(%arg0: i32) -> (i32, i32) {
    %c0_i32 = arith.constant 0 : i32
    %c0_i32_0 = arith.constant 0 : i32
    %c0_i32_1 = arith.constant 0 : i32
    return %c0_i32, %c0_i32_0 : i32, i32
  }
  func.func @transform_8(%arg0: i32) -> (i32, i32) {
    %c0_i32 = arith.constant 0 : i32
    %c0_i32_0 = arith.constant 0 : i32
    %c0_i32_1 = arith.constant 0 : i32
    return %c0_i32, %c0_i32_0 : i32, i32
  }
  func.func @transform_9(%arg0: i32) -> (i32, i32) {
    %c0_i32 = arith.constant 0 : i32
    %c0_i32_0 = arith.constant 0 : i32
    return %arg0, %c0_i32 : i32, i32
  }
}

</mosaic_0001>

<llo_original>
// kernel: tpu_custom_call.1
$region0: #{tpu_custom_call.1}
  #allocation0 [shape = 'u32[]', space=smem, size = 0x4, offset = 0x4, fixed_abs, tag = 'smem constant byte address 0x4 - core index']
  #allocation1 [shape = 'u32[144,128]{1,0:T(1,128)}', space=vmem, size = 0x12000, scoped, tag = 'internal scratch']
  %s0 = inlined_call_operand.hbm [shape: bf16[8,12], index: 0, kind: input, shape index: {}]
  %s1 = inlined_call_operand.hbm [shape: bf16[12,512], index: 1, kind: input, shape index: {}]
  %s2 = inlined_call_operand.hbm [shape: f32[1,512], index: 2, kind: input, shape index: {}]
  %s3 = inlined_call_operand.hbm [shape: bf16[512,128], index: 3, kind: input, shape index: {}]
  %s4 = inlined_call_operand.vmem [shape: f32[1,128], index: 4, kind: input, shape index: {}]
  %s5 = inlined_call_operand.hbm [shape: bf16[128,128], index: 5, kind: input, shape index: {}]
  %s6 = inlined_call_operand.vmem [shape: f32[1,128], index: 6, kind: input, shape index: {}]
  %s7 = inlined_call_operand.hbm [shape: bf16[128,128], index: 7, kind: input, shape index: {}]
  %s8 = inlined_call_operand.vmem [shape: f32[1,128], index: 8, kind: input, shape index: {}]
  %s9 = inlined_call_operand.hbm [shape: f32[8,128], index: 9, kind: output, shape index: {}]
  %s10 = sld [smem:[#allocation0]]
  $region70: #{tpu_custom_call.1} parent=0
    _
  %s12 = ssub.s32 1, %s10
  %s13 = scalar_select 0, %s12, %s10
  $region1: #{tpu_custom_call.1} parent=0
    #allocation2 [shape = 'u8[2048]{0}', space=vmem, size = 0x800, scoped, tag = 'input window, operand 0, single buffered']
    #allocation3 [shape = 's32[1]{0}', space=sflag, size = 0x4, scoped, tag = 'scoped memory for tpu_custom_call.1']
    #allocation4 [shape = 's32[1]{0}', space=sflag, size = 0x4, scoped, tag = 'scoped memory for tpu_custom_call.1']
    #allocation5 [shape = 'u8[16384]{0}', space=vmem, size = 0x4000, scoped, tag = 'input window, operand 1, single buffered']
    #allocation6 [shape = 's32[1]{0}', space=sflag, size = 0x4, scoped, tag = 'scoped memory for tpu_custom_call.1']
    #allocation7 [shape = 'u8[2048]{0}', space=vmem, size = 0x800, scoped, tag = 'input window, operand 2, single buffered']
    #allocation8 [shape = 'u8[131072]{0}', space=vmem, size = 0x20000, scoped, tag = 'input window, operand 3, single buffered']
    #allocation9 [shape = 's32[1]{0}', space=sflag, size = 0x4, scoped, tag = 'scoped memory for tpu_custom_call.1']
    #allocation10 [shape = 'u8[32768]{0}', space=vmem, size = 0x8000, scoped, tag = 'input window, operand 5, single buffered']
    #allocation11 [shape = 'u8[32768]{0}', space=vmem, size = 0x8000, scoped, tag = 'input window, operand 7, single buffered']
    #allocation12 [shape = 's32[1]{0}', space=sflag, size = 0x4, scoped, tag = 'scoped memory for tpu_custom_call.1']
    #allocation13 [shape = 'u8[4096]{0}', space=vmem, size = 0x1000, scoped, tag = 'output window, operand 0, single buffered']
    %14 = vsyncpa [#allocation3], 0
    %15 = vsyncpa [#allocation6], 0
    %16 = vsyncpa [#allocation9], 0
    %17 = vsyncpa [#allocation12], 0
    %18 = vsyncpa [#allocation4], 0
    // Predicated region
    $region2: #{tpu_custom_call.1} parent=1 // pred_check
      _
    $region3: #{tpu_custom_call.1} parent=1 // pred_check_branch
      %20 = sbr.rel (0) target = $region5
    $region4: #{tpu_custom_call.1} parent=1 // pred_region
      %s22 = ssub.s32 64, 64
      %23 = vsyncadd [#allocation3], %s22
      %s25 = sshll.u32 [#allocation2], 4
      %s26 = int_to_ptr.vmem [resolvable:$true] %s25
      %28 = dma.hbm_to_vmem [thread:$0]  %s0, 64, %s26, [#allocation3]
    $region5: #{tpu_custom_call.1} parent=1 // pred_fallthru
      _
    // Predicated region
    $region6: #{tpu_custom_call.1} parent=1 // pred_check
      _
    $region7: #{tpu_custom_call.1} parent=1 // pred_check_branch
      %30 = sbr.rel (0) target = $region9
    $region8: #{tpu_custom_call.1} parent=1 // pred_region
      %s32 = ssub.s32 512, 512
      %33 = vsyncadd [#allocation6], %s32
      %s34 = sshll.u32 [#allocation5], 4
      %s35 = int_to_ptr.vmem [resolvable:$true] %s34
      %40 = dma.hbm_to_vmem [thread:$0]  %s1, 512, %s35, [#allocation6], 256, 256, 16
    $region9: #{tpu_custom_call.1} parent=1 // pred_fallthru
      _
    // Predicated region
    $region10: #{tpu_custom_call.1} parent=1 // pred_check
      _
    $region11: #{tpu_custom_call.1} parent=1 // pred_check_branch
      %42 = sbr.rel (0) target = $region13
    $region12: #{tpu_custom_call.1} parent=1 // pred_region
      %s44 = ssub.s32 64, 64
      %45 = vsyncadd [#allocation6], %s44
      %s47 = sshll.u32 [#allocation7], 4
      %s48 = int_to_ptr.vmem [resolvable:$true] %s47
      %50 = dma.hbm_to_vmem [thread:$0]  %s2, 64, %s48, [#allocation6]
    $region13: #{tpu_custom_call.1} parent=1 // pred_fallthru
      _
    // Predicated region
    $region14: #{tpu_custom_call.1} parent=1 // pred_check
      _
    $region15: #{tpu_custom_call.1} parent=1 // pred_check_branch
      %52 = sbr.rel (0) target = $region17
    $region16: #{tpu_custom_call.1} parent=1 // pred_region
      %s54 = ssub.s32 4096, 4096
      %55 = vsyncadd [#allocation9], %s54
      %s56 = sshll.u32 [#allocation8], 4
      %s57 = int_to_ptr.vmem [resolvable:$true] %s56
      %62 = dma.hbm_to_vmem [thread:$0]  %s3, 4096, %s57, [#allocation9], 64, 64, 4
    $region17: #{tpu_custom_call.1} parent=1 // pred_fallthru
      _
    // Predicated region
    $region18: #{tpu_custom_call.1} parent=1 // pred_check
      _
    $region19: #{tpu_custom_call.1} parent=1 // pred_check_branch
      %64 = sbr.rel (0) target = $region21
    $region20: #{tpu_custom_call.1} parent=1 // pred_region
      _
    $region21: #{tpu_custom_call.1} parent=1 // pred_fallthru
      _
    // Predicated region
    $region22: #{tpu_custom_call.1} parent=1 // pred_check
      _
    $region23: #{tpu_custom_call.1} parent=1 // pred_check_branch
      %66 = sbr.rel (0) target = $region25
    $region24: #{tpu_custom_call.1} parent=1 // pred_region
      %s68 = ssub.s32 1024, 1024
      %69 = vsyncadd [#allocation9], %s68
      %s70 = sshll.u32 [#allocation10], 4
      %s71 = int_to_ptr.vmem [resolvable:$true] %s70
      %76 = dma.hbm_to_vmem [thread:$0]  %s5, 1024, %s71, [#allocation9], 64, 64, 4
    $region25: #{tpu_custom_call.1} parent=1 // pred_fallthru
      _
    // Predicated region
    $region26: #{tpu_custom_call.1} parent=1 // pred_check
      _
    $region27: #{tpu_custom_call.1} parent=1 // pred_check_branch
      %78 = sbr.rel (0) target = $region29
    $region28: #{tpu_custom_call.1} parent=1 // pred_region
      _
    $region29: #{tpu_custom_call.1} parent=1 // pred_fallthru
      _
    // Predicated region
    $region30: #{tpu_custom_call.1} parent=1 // pred_check
      _
    $region31: #{tpu_custom_call.1} parent=1 // pred_check_branch
      %80 = sbr.rel (0) target = $region33
    $region32: #{tpu_custom_call.1} parent=1 // pred_region
      %s82 = ssub.s32 1024, 1024
      %83 = vsyncadd [#allocation12], %s82
      %s84 = sshll.u32 [#allocation11], 4
      %s85 = int_to_ptr.vmem [resolvable:$true] %s84
      %90 = dma.hbm_to_vmem [thread:$0]  %s7, 1024, %s85, [#allocation12], 64, 64, 4
    $region33: #{tpu_custom_call.1} parent=1 // pred_fallthru
      _
    // Predicated region
    $region34: #{tpu_custom_call.1} parent=1 // pred_check
      _
    $region35: #{tpu_custom_call.1} parent=1 // pred_check_branch
      %92 = sbr.rel (0) target = $region37
    $region36: #{tpu_custom_call.1} parent=1 // pred_region
      _
    $region37: #{tpu_custom_call.1} parent=1 // pred_fallthru
      _
    // Predicated region
    $region38: #{tpu_custom_call.1} parent=1 // pred_check
      _
    $region39: #{tpu_custom_call.1} parent=1 // pred_check_branch
      %94 = sbr.rel (0) target = $region41
    $region40: #{tpu_custom_call.1} parent=1 // pred_region
      %95 = dma.done [#allocation3], 64
    $region41: #{tpu_custom_call.1} parent=1 // pred_fallthru
      _
    // Predicated region
    $region42: #{tpu_custom_call.1} parent=1 // pred_check
      _
    $region43: #{tpu_custom_call.1} parent=1 // pred_check_branch
      %97 = sbr.rel (0) target = $region45
    $region44: #{tpu_custom_call.1} parent=1 // pred_region
      %98 = dma.done [#allocation6], 512
    $region45: #{tpu_custom_call.1} parent=1 // pred_fallthru
      _
    // Predicated region
    $region46: #{tpu_custom_call.1} parent=1 // pred_check
      _
    $region47: #{tpu_custom_call.1} parent=1 // pred_check_branch
      %100 = sbr.rel (0) target = $region49
    $region48: #{tpu_custom_call.1} parent=1 // pred_region
      %101 = dma.done [#allocation6], 64
    $region49: #{tpu_custom_call.1} parent=1 // pred_fallthru
      _
    // Predicated region
    $region50: #{tpu_custom_call.1} parent=1 // pred_check
      _
    $region51: #{tpu_custom_call.1} parent=1 // pred_check_branch
      %103 = sbr.rel (0) target = $region53
    $region52: #{tpu_custom_call.1} parent=1 // pred_region
      %104 = dma.done [#allocation9], 4096
    $region53: #{tpu_custom_call.1} parent=1 // pred_fallthru
      _
    // Predicated region
    $region54: #{tpu_custom_call.1} parent=1 // pred_check
      _
    $region55: #{tpu_custom_call.1} parent=1 // pred_check_branch
      %106 = sbr.rel (0) target = $region57
    $region56: #{tpu_custom_call.1} parent=1 // pred_region
      %107 = dma.done [#allocation9], 1024
    $region57: #{tpu_custom_call.1} parent=1 // pred_fallthru
      _
    // Predicated region
    $region58: #{tpu_custom_call.1} parent=1 // pred_check
      _
    $region59: #{tpu_custom_call.1} parent=1 // pred_check_branch
      %109 = sbr.rel (0) target = $region61
    $region60: #{tpu_custom_call.1} parent=1 // pred_region
      %110 = dma.done [#allocation12], 1024
    $region61: #{tpu_custom_call.1} parent=1 // pred_fallthru
      _
    %v112 = vld [vmem:[#allocation2] sm:$0xf]
    %v113 = vld [vmem:[#allocation5] sm:$0xff]
    %v114 = vld [vmem:[#allocation5 + $0x8] sm:$0xff]
    %v115 = vld [vmem:[#allocation5 + $0x10] sm:$0x33]
    %v116 = vld [vmem:[#allocation5 + $0x18] sm:$0x33]
    %v117 = vld [vmem:[#allocation7] sm:$0xf]
    %v119 = vlaneseq
    %v120 = vshrl.u32 %v119, 7
    %v121 = vsub.s32 0, %v120
    %v122 = vrot.slane %v117, %v121
    %v123 = vlaneseq
    %v124 = vshrl.u32 %v123, 7
    %v125 = vsub.s32 1, %v124
    %v126 = vrot.slane %v117, %v125
    %v127 = vlaneseq
    %v128 = vshrl.u32 %v127, 7
    %v129 = vsub.s32 2, %v128
    %v130 = vrot.slane %v117, %v129
    %v131 = vlaneseq
    %v132 = vshrl.u32 %v131, 7
    %v133 = vsub.s32 3, %v132
    %v134 = vrot.slane %v117, %v133
    %v143 = vunpack.c.l.b16 %v113
    %v144 = vunpack.c.h.b16 %v113
    %v145 = vunpack.c.l.b16 %v114
    %v146 = vunpack.c.h.b16 %v114
    %v147 = vunpack.c.l.b16 %v115
    %v148 = vunpack.c.h.b16 %v115
    %v149 = vunpack.c.l.b16 %v116
    %v150 = vunpack.c.h.b16 %v116
    %v151 = vpack.c.b16 %v147, %v143
    %v152 = vpack.c.b16 %v148, %v144
    %v153 = vpack.c.b16 %v149, %v145
    %v154 = vpack.c.b16 %v150, %v146
    %vm155 = vcmask 97280
    %v157 = vsel %vm155, %v112, 0
    %vm159 = vcmask 1045504
    %v161 = vsel %vm159, %v151, 0
    %v164 = vsel %vm159, %v152, 0
    %v167 = vsel %vm159, %v153, 0
    %v170 = vsel %vm159, %v154, 0
    %172 = vmatprep.subr.bf16.mxu0 0
    %173 = vmatpush1.bf16.msra.mxu0 0
    %174 = vmatprep.subr.bf16.mxu0 0
    %175 = vmatpush1.bf16.msra.mxu0 0
    %176 = vmatprep.subr.bf16.mxu0 0
    %177 = vmatpush1.bf16.msra.mxu0 0
    %178 = vmatprep.subr.bf16.mxu0 0
    %179 = vmatpush1.bf16.msra.mxu0 0
    %180 = vmatprep.subr.bf16.mxu0 0
    %181 = vmatpush1.bf16.msra.mxu0 0
    %182 = vmatprep.subr.bf16.mxu0 0
    %183 = vmatpush1.bf16.msra.mxu0 0
    %184 = vmatprep.subr.bf16.mxu0 0
    %185 = vmatpush1.bf16.msra.mxu0 0
    %186 = vmatprep.subr.bf16.mxu0 %v164
    %187 = vmatpush1.bf16.msra.mxu0 %v161
    %188 = vmatprep.subr.bf16.mxu0 0
    %189 = vmatpush2.bf16.msra.mxu0 0
    %190 = vmatprep.subr.bf16.mxu0 0
    %191 = vmatpush2.bf16.msra.mxu0 0
    %192 = vmatprep.subr.bf16.mxu0 0
    %193 = vmatpush2.bf16.msra.mxu0 0
    %194 = vmatprep.subr.bf16.mxu0 0
    %195 = vmatpush2.bf16.msra.mxu0 0
    %196 = vmatprep.subr.bf16.mxu0 0
    %197 = vmatpush2.bf16.msra.mxu0 0
    %198 = vmatprep.subr.bf16.mxu0 0
    %199 = vmatpush2.bf16.msra.mxu0 0
    %200 = vmatprep.subr.bf16.mxu0 0
    %201 = vmatpush2.bf16.msra.mxu0 0
    %202 = vmatprep.subr.bf16.mxu0 0
    %203 = vmatpush2.bf16.msra.mxu0 0
    %204 = vmatprep.mubr.bf16.mxu0 0
    %205 = vmatmul.mubr.bf16.gmra.mxu0 %v157
    %v206 = vpop.f32.mrf.mxu0
    %v207 = vadd.f32 %v122, %v206
    %v208 = vpop.f32.mrf.mxu0
    %v209 = vadd.f32 %v126, %v208
    %v210 = vpop.f32.mrf.mxu0
    %v211 = vpop.f32.mrf.mxu0
    %212 = vdwg.mxu0
    %213 = vmatprep.subr.bf16.mxu0 0
    %214 = vmatpush1.bf16.msra.mxu0 0
    %215 = vmatprep.subr.bf16.mxu0 0
    %216 = vmatpush1.bf16.msra.mxu0 0
    %217 = vmatprep.subr.bf16.mxu0 0
    %218 = vmatpush1.bf16.msra.mxu0 0
    %219 = vmatprep.subr.bf16.mxu0 0
    %220 = vmatpush1.bf16.msra.mxu0 0
    %221 = vmatprep.subr.bf16.mxu0 0
    %222 = vmatpush1.bf16.msra.mxu0 0
    %223 = vmatprep.subr.bf16.mxu0 0
    %224 = vmatpush1.bf16.msra.mxu0 0
    %225 = vmatprep.subr.bf16.mxu0 0
    %226 = vmatpush1.bf16.msra.mxu0 0
    %227 = vmatprep.subr.bf16.mxu0 %v170
    %228 = vmatpush1.bf16.msra.mxu0 %v167
    %229 = vmatprep.subr.bf16.mxu0 0
    %230 = vmatpush2.bf16.msra.mxu0 0
    %231 = vmatprep.subr.bf16.mxu0 0
    %232 = vmatpush2.bf16.msra.mxu0 0
    %233 = vmatprep.subr.bf16.mxu0 0
    %234 = vmatpush2.bf16.msra.mxu0 0
    %235 = vmatprep.subr.bf16.mxu0 0
    %236 = vmatpush2.bf16.msra.mxu0 0
    %237 = vmatprep.subr.bf16.mxu0 0
    %238 = vmatpush2.bf16.msra.mxu0 0
    %239 = vmatprep.subr.bf16.mxu0 0
    %240 = vmatpush2.bf16.msra.mxu0 0
    %241 = vmatprep.subr.bf16.mxu0 0
    %242 = vmatpush2.bf16.msra.mxu0 0
    %243 = vmatprep.subr.bf16.mxu0 0
    %244 = vmatpush2.bf16.msra.mxu0 0
    %245 = vmatprep.mubr.bf16.mxu0 0
    %246 = vmatmul.mubr.bf16.gmra.mxu0 %v157
    %v247 = vpop.f32.mrf.mxu0
    %v248 = vadd.f32 %v130, %v247
    %v249 = vpop.f32.mrf.mxu0
    %v250 = vadd.f32 %v134, %v249
    %v251 = vpop.f32.mrf.mxu0
    %v252 = vpop.f32.mrf.mxu0
    %253 = vdwg.mxu0
    %v254 = vmax.f32 %v207, 0.0
    %v255 = vmax.f32 %v209, 0.0
    %v256 = vmax.f32 %v248, 0.0
    %v257 = vmax.f32 %v250, 0.0
    %v258 = vpack.c.bf16 %v254, %v254
    %v259 = vpack.c.bf16 %v255, %v255
    %v260 = vpack.c.bf16 %v256, %v256
    %v261 = vpack.c.bf16 %v257, %v257
    %v262 = vld [vmem:[#allocation8] sm:$0xf]
    %v263 = vld [vmem:[#allocation8 + $0x4] sm:$0xf]
    %v264 = vld [vmem:[#allocation8 + $0x8] sm:$0xf]
    %v265 = vld [vmem:[#allocation8 + $0xc] sm:$0xf]
    %v266 = vld [vmem:[#allocation8 + $0x10] sm:$0xf]
    %v267 = vld [vmem:[#allocation8 + $0x14] sm:$0xf]
    %v268 = vld [vmem:[#allocation8 + $0x18] sm:$0xf]
    %v269 = vld [vmem:[#allocation8 + $0x1c] sm:$0xf]
    %v270 = vld [vmem:[#allocation8 + $0x20] sm:$0xf]
    %v271 = vld [vmem:[#allocation8 + $0x24] sm:$0xf]
    %v272 = vld [vmem:[#allocation8 + $0x28] sm:$0xf]
    %v273 = vld [vmem:[#allocation8 + $0x2c] sm:$0xf]
    %v274 = vld [vmem:[#allocation8 + $0x30] sm:$0xf]
    %v275 = vld [vmem:[#allocation8 + $0x34] sm:$0xf]
    %v276 = vld [vmem:[#allocation8 + $0x38] sm:$0xf]
    %v277 = vld [vmem:[#allocation8 + $0x3c] sm:$0xf]
    %v278 = vld [vmem:[#allocation8 + $0x40] sm:$0xf]
    %v279 = vld [vmem:[#allocation8 + $0x44] sm:$0xf]
    %v280 = vld [vmem:[#allocation8 + $0x48] sm:$0xf]
    %v281 = vld [vmem:[#allocation8 + $0x4c] sm:$0xf]
    %v282 = vld [vmem:[#allocation8 + $0x50] sm:$0xf]
    %v283 = vld [vmem:[#allocation8 + $0x54] sm:$0xf]
    %v284 = vld [vmem:[#allocation8 + $0x58] sm:$0xf]
    %v285 = vld [vmem:[#allocation8 + $0x5c] sm:$0xf]
    %v286 = vld [vmem:[#allocation8 + $0x60] sm:$0xf]
    %v287 = vld [vmem:[#allocation8 + $0x64] sm:$0xf]
    %v288 = vld [vmem:[#allocation8 + $0x68] sm:$0xf]
    %v289 = vld [vmem:[#allocation8 + $0x6c] sm:$0xf]
    %v290 = vld [vmem:[#allocation8 + $0x70] sm:$0xf]
    %v291 = vld [vmem:[#allocation8 + $0x74] sm:$0xf]
    %v292 = vld [vmem:[#allocation8 + $0x78] sm:$0xf]
    %v293 = vld [vmem:[#allocation8 + $0x7c] sm:$0xf]
    %v294 = vld [vmem:[#allocation8 + $0x80] sm:$0xf]
    %v295 = vld [vmem:[#allocation8 + $0x84] sm:$0xf]
    %v296 = vld [vmem:[#allocation8 + $0x88] sm:$0xf]
    %v297 = vld [vmem:[#allocation8 + $0x8c] sm:$0xf]
    %v298 = vld [vmem:[#allocation8 + $0x90] sm:$0xf]
    %v299 = vld [vmem:[#allocation8 + $0x94] sm:$0xf]
    %v300 = vld [vmem:[#allocation8 + $0x98] sm:$0xf]
    %v301 = vld [vmem:[#allocation8 + $0x9c] sm:$0xf]
    %v302 = vld [vmem:[#allocation8 + $0xa0] sm:$0xf]
    %v303 = vld [vmem:[#allocation8 + $0xa4] sm:$0xf]
    %v304 = vld [vmem:[#allocation8 + $0xa8] sm:$0xf]
    %v305 = vld [vmem:[#allocation8 + $0xac] sm:$0xf]
    %v306 = vld [vmem:[#allocation8 + $0xb0] sm:$0xf]
    %v307 = vld [vmem:[#allocation8 + $0xb4] sm:$0xf]
    %v308 = vld [vmem:[#allocation8 + $0xb8] sm:$0xf]
    %v309 = vld [vmem:[#allocation8 + $0xbc] sm:$0xf]
    %v310 = vld [vmem:[#allocation8 + $0xc0] sm:$0xf]
    %v311 = vld [vmem:[#allocation8 + $0xc4] sm:$0xf]
    %v312 = vld [vmem:[#allocation8 + $0xc8] sm:$0xf]
    %v313 = vld [vmem:[#allocation8 + $0xcc] sm:$0xf]
    %v314 = vld [vmem:[#allocation8 + $0xd0] sm:$0xf]
    %v315 = vld [vmem:[#allocation8 + $0xd4] sm:$0xf]
    %v316 = vld [vmem:[#allocation8 + $0xd8] sm:$0xf]
    %v317 = vld [vmem:[#allocation8 + $0xdc] sm:$0xf]
    %v318 = vld [vmem:[#allocation8 + $0xe0] sm:$0xf]
    %v319 = vld [vmem:[#allocation8 + $0xe4] sm:$0xf]
    %v320 = vld [vmem:[#allocation8 + $0xe8] sm:$0xf]
    %v321 = vld [vmem:[#allocation8 + $0xec] sm:$0xf]
    %v322 = vld [vmem:[#allocation8 + $0xf0] sm:$0xf]
    %v323 = vld [vmem:[#allocation8 + $0xf4] sm:$0xf]
    %v324 = vld [vmem:[#allocation8 + $0xf8] sm:$0xf]
    %v325 = vld [vmem:[#allocation8 + $0xfc] sm:$0xf]
    %v326 = vld [vmem:[%s4] sm:$0x1]
    %v328 = vlaneseq
    %v329 = vshrl.u32 %v328, 7
    %v330 = vsub.s32 0, %v329
    %v331 = vrot.slane %v326, %v330
    %v397 = vunpack.c.l.b16 %v262
    %v398 = vunpack.c.l.b16 %v263
    %v399 = vunpack.c.l.b16 %v264
    %v400 = vunpack.c.l.b16 %v265
    %v401 = vunpack.c.l.b16 %v266
    %v402 = vunpack.c.l.b16 %v267
    %v403 = vunpack.c.l.b16 %v268
    %v404 = vunpack.c.l.b16 %v269
    %v405 = vunpack.c.l.b16 %v270
    %v406 = vunpack.c.l.b16 %v271
    %v407 = vunpack.c.l.b16 %v272
    %v408 = vunpack.c.l.b16 %v273
    %v409 = vunpack.c.l.b16 %v274
    %v410 = vunpack.c.l.b16 %v275
    %v411 = vunpack.c.l.b16 %v276
    %v412 = vunpack.c.l.b16 %v277
    %v413 = vunpack.c.l.b16 %v278
    %v414 = vunpack.c.l.b16 %v279
    %v415 = vunpack.c.l.b16 %v280
    %v416 = vunpack.c.l.b16 %v281
    %v417 = vunpack.c.l.b16 %v282
    %v418 = vunpack.c.l.b16 %v283
    %v419 = vunpack.c.l.b16 %v284
    %v420 = vunpack.c.l.b16 %v285
    %v421 = vunpack.c.l.b16 %v286
    %v422 = vunpack.c.l.b16 %v287
    %v423 = vunpack.c.l.b16 %v288
    %v424 = vunpack.c.l.b16 %v289
    %v425 = vunpack.c.l.b16 %v290
    %v426 = vunpack.c.l.b16 %v291
    %v427 = vunpack.c.l.b16 %v292
    %v428 = vunpack.c.l.b16 %v293
    %v429 = vunpack.c.l.b16 %v294
    %v430 = vunpack.c.l.b16 %v295
    %v431 = vunpack.c.l.b16 %v296
    %v432 = vunpack.c.l.b16 %v297
    %v433 = vunpack.c.l.b16 %v298
    %v434 = vunpack.c.l.b16 %v299
    %v435 = vunpack.c.l.b16 %v300
    %v436 = vunpack.c.l.b16 %v301
    %v437 = vunpack.c.l.b16 %v302
    %v438 = vunpack.c.l.b16 %v303
    %v439 = vunpack.c.l.b16 %v304
    %v440 = vunpack.c.l.b16 %v305
    %v441 = vunpack.c.l.b16 %v306
    %v442 = vunpack.c.l.b16 %v307
    %v443 = vunpack.c.l.b16 %v308
    %v444 = vunpack.c.l.b16 %v309
    %v445 = vunpack.c.l.b16 %v310
    %v446 = vunpack.c.l.b16 %v311
    %v447 = vunpack.c.l.b16 %v312
    %v448 = vunpack.c.l.b16 %v313
    %v449 = vunpack.c.l.b16 %v314
    %v450 = vunpack.c.l.b16 %v315
    %v451 = vunpack.c.l.b16 %v316
    %v452 = vunpack.c.l.b16 %v317
    %v453 = vunpack.c.l.b16 %v318
    %v454 = vunpack.c.l.b16 %v319
    %v455 = vunpack.c.l.b16 %v320
    %v456 = vunpack.c.l.b16 %v321
    %v457 = vunpack.c.l.b16 %v322
    %v458 = vunpack.c.l.b16 %v323
    %v459 = vunpack.c.l.b16 %v324
    %v460 = vunpack.c.l.b16 %v325
    %v461 = vpack.c.b16 %v398, %v397
    %v462 = vpack.c.b16 %v400, %v399
    %v463 = vpack.c.b16 %v402, %v401
    %v464 = vpack.c.b16 %v404, %v403
    %v465 = vpack.c.b16 %v406, %v405
    %v466 = vpack.c.b16 %v408, %v407
    %v467 = vpack.c.b16 %v410, %v409
    %v468 = vpack.c.b16 %v412, %v411
    %v469 = vpack.c.b16 %v414, %v413
    %v470 = vpack.c.b16 %v416, %v415
    %v471 = vpack.c.b16 %v418, %v417
    %v472 = vpack.c.b16 %v420, %v419
    %v473 = vpack.c.b16 %v422, %v421
    %v474 = vpack.c.b16 %v424, %v423
    %v475 = vpack.c.b16 %v426, %v425
    %v476 = vpack.c.b16 %v428, %v427
    %v477 = vpack.c.b16 %v430, %v429
    %v478 = vpack.c.b16 %v432, %v431
    %v479 = vpack.c.b16 %v434, %v433
    %v480 = vpack.c.b16 %v436, %v435
    %v481 = vpack.c.b16 %v438, %v437
    %v482 = vpack.c.b16 %v440, %v439
    %v483 = vpack.c.b16 %v442, %v441
    %v484 = vpack.c.b16 %v444, %v443
    %v485 = vpack.c.b16 %v446, %v445
    %v486 = vpack.c.b16 %v448, %v447
    %v487 = vpack.c.b16 %v450, %v449
    %v488 = vpack.c.b16 %v452, %v451
    %v489 = vpack.c.b16 %v454, %v453
    %v490 = vpack.c.b16 %v456, %v455
    %v491 = vpack.c.b16 %v458, %v457
    %v492 = vpack.c.b16 %v460, %v459
    %525 = vmatprep.subr.bf16.mxu0 0
    %526 = vmatpush1.bf16.msra.mxu0 %v468
    %527 = vmatprep.subr.bf16.mxu0 0
    %528 = vmatpush1.bf16.msra.mxu0 %v467
    %529 = vmatprep.subr.bf16.mxu0 0
    %530 = vmatpush1.bf16.msra.mxu0 %v466
    %531 = vmatprep.subr.bf16.mxu0 0
    %532 = vmatpush1.bf16.msra.mxu0 %v465
    %533 = vmatprep.subr.bf16.mxu0 0
    %534 = vmatpush1.bf16.msra.mxu0 %v464
    %535 = vmatprep.subr.bf16.mxu0 0
    %536 = vmatpush1.bf16.msra.mxu0 %v463
    %537 = vmatprep.subr.bf16.mxu0 0
    %538 = vmatpush1.bf16.msra.mxu0 %v462
    %539 = vmatprep.subr.bf16.mxu0 0
    %540 = vmatpush1.bf16.msra.mxu0 %v461
    %541 = vmatprep.subr.bf16.mxu0 0
    %542 = vmatpush2.bf16.msra.mxu0 %v476
    %543 = vmatprep.subr.bf16.mxu0 0
    %544 = vmatpush2.bf16.msra.mxu0 %v475
    %545 = vmatprep.subr.bf16.mxu0 0
    %546 = vmatpush2.bf16.msra.mxu0 %v474
    %547 = vmatprep.subr.bf16.mxu0 0
    %548 = vmatpush2.bf16.msra.mxu0 %v473
    %549 = vmatprep.subr.bf16.mxu0 0
    %550 = vmatpush2.bf16.msra.mxu0 %v472
    %551 = vmatprep.subr.bf16.mxu0 0
    %552 = vmatpush2.bf16.msra.mxu0 %v471
    %553 = vmatprep.subr.bf16.mxu0 0
    %554 = vmatpush2.bf16.msra.mxu0 %v470
    %555 = vmatprep.subr.bf16.mxu0 0
    %556 = vmatpush2.bf16.msra.mxu0 %v469
    %557 = vmatprep.mubr.bf16.mxu0 %v259
    %558 = vmatmul.mubr.bf16.gmra.mxu0 %v258
    %v559 = vpop.f32.mrf.mxu0
    %v560 = vadd.f32 %v331, %v559
    %v561 = vpop.f32.mrf.mxu0
    %v562 = vpop.f32.mrf.mxu0
    %v563 = vpop.f32.mrf.mxu0
    %564 = vdwg.mxu0
    %565 = vmatprep.subr.bf16.mxu0 0
    %566 = vmatpush1.bf16.msra.mxu0 %v484
    %567 = vmatprep.subr.bf16.mxu0 0
    %568 = vmatpush1.bf16.msra.mxu0 %v483
    %569 = vmatprep.subr.bf16.mxu0 0
    %570 = vmatpush1.bf16.msra.mxu0 %v482
    %571 = vmatprep.subr.bf16.mxu0 0
    %572 = vmatpush1.bf16.msra.mxu0 %v481
    %573 = vmatprep.subr.bf16.mxu0 0
    %574 = vmatpush1.bf16.msra.mxu0 %v480
    %575 = vmatprep.subr.bf16.mxu0 0
    %576 = vmatpush1.bf16.msra.mxu0 %v479
    %577 = vmatprep.subr.bf16.mxu0 0
    %578 = vmatpush1.bf16.msra.mxu0 %v478
    %579 = vmatprep.subr.bf16.mxu0 0
    %580 = vmatpush1.bf16.msra.mxu0 %v477
    %581 = vmatprep.subr.bf16.mxu0 0
    %582 = vmatpush2.bf16.msra.mxu0 %v492
    %583 = vmatprep.subr.bf16.mxu0 0
    %584 = vmatpush2.bf16.msra.mxu0 %v491
    %585 = vmatprep.subr.bf16.mxu0 0
    %586 = vmatpush2.bf16.msra.mxu0 %v490
    %587 = vmatprep.subr.bf16.mxu0 0
    %588 = vmatpush2.bf16.msra.mxu0 %v489
    %589 = vmatprep.subr.bf16.mxu0 0
    %590 = vmatpush2.bf16.msra.mxu0 %v488
    %591 = vmatprep.subr.bf16.mxu0 0
    %592 = vmatpush2.bf16.msra.mxu0 %v487
    %593 = vmatprep.subr.bf16.mxu0 0
    %594 = vmatpush2.bf16.msra.mxu0 %v486
    %595 = vmatprep.subr.bf16.mxu0 0
    %596 = vmatpush2.bf16.msra.mxu0 %v485
    %597 = vmatprep.mubr.bf16.mxu0 %v261
    %598 = vmatmul.mubr.bf16.gmra.mxu0 %v260
    %v599 = vpop.f32.mrf.mxu0
    %v600 = vadd.f32 %v560, %v599
    %v601 = vpop.f32.mrf.mxu0
    %v602 = vpop.f32.mrf.mxu0
    %v603 = vpop.f32.mrf.mxu0
    %604 = vdwg.mxu0
    %v605 = vmax.f32 %v600, 0.0
    %v606 = vpack.c.bf16 %v605, %v605
    %v607 = vld [vmem:[#allocation10] sm:$0xf]
    %v608 = vld [vmem:[#allocation10 + $0x4] sm:$0xf]
    %v609 = vld [vmem:[#allocation10 + $0x8] sm:$0xf]
    %v610 = vld [vmem:[#allocation10 + $0xc] sm:$0xf]
    %v611 = vld [vmem:[#allocation10 + $0x10] sm:$0xf]
    %v612 = vld [vmem:[#allocation10 + $0x14] sm:$0xf]
    %v613 = vld [vmem:[#allocation10 + $0x18] sm:$0xf]
    %v614 = vld [vmem:[#allocation10 + $0x1c] sm:$0xf]
    %v615 = vld [vmem:[#allocation10 + $0x20] sm:$0xf]
    %v616 = vld [vmem:[#allocation10 + $0x24] sm:$0xf]
    %v617 = vld [vmem:[#allocation10 + $0x28] sm:$0xf]
    %v618 = vld [vmem:[#allocation10 + $0x2c] sm:$0xf]
    %v619 = vld [vmem:[#allocation10 + $0x30] sm:$0xf]
    %v620 = vld [vmem:[#allocation10 + $0x34] sm:$0xf]
    %v621 = vld [vmem:[#allocation10 + $0x38] sm:$0xf]
    %v622 = vld [vmem:[#allocation10 + $0x3c] sm:$0xf]
    %v623 = vld [vmem:[%s6] sm:$0x1]
    %v625 = vlaneseq
    %v626 = vshrl.u32 %v625, 7
    %v627 = vsub.s32 0, %v626
    %v628 = vrot.slane %v623, %v627
    %v646 = vunpack.c.l.b16 %v607
    %v647 = vunpack.c.l.b16 %v608
    %v648 = vunpack.c.l.b16 %v609
    %v649 = vunpack.c.l.b16 %v610
    %v650 = vunpack.c.l.b16 %v611
    %v651 = vunpack.c.l.b16 %v612
    %v652 = vunpack.c.l.b16 %v613
    %v653 = vunpack.c.l.b16 %v614
    %v654 = vunpack.c.l.b16 %v615
    %v655 = vunpack.c.l.b16 %v616
    %v656 = vunpack.c.l.b16 %v617
    %v657 = vunpack.c.l.b16 %v618
    %v658 = vunpack.c.l.b16 %v619
    %v659 = vunpack.c.l.b16 %v620
    %v660 = vunpack.c.l.b16 %v621
    %v661 = vunpack.c.l.b16 %v622
    %v662 = vpack.c.b16 %v647, %v646
    %v663 = vpack.c.b16 %v649, %v648
    %v664 = vpack.c.b16 %v651, %v650
    %v665 = vpack.c.b16 %v653, %v652
    %v666 = vpack.c.b16 %v655, %v654
    %v667 = vpack.c.b16 %v657, %v656
    %v668 = vpack.c.b16 %v659, %v658
    %v669 = vpack.c.b16 %v661, %v660
    %678 = vmatprep.subr.bf16.mxu0 0
    %679 = vmatpush1.bf16.msra.mxu0 %v669
    %680 = vmatprep.subr.bf16.mxu0 0
    %681 = vmatpush1.bf16.msra.mxu0 %v668
    %682 = vmatprep.subr.bf16.mxu0 0
    %683 = vmatpush1.bf16.msra.mxu0 %v667
    %684 = vmatprep.subr.bf16.mxu0 0
    %685 = vmatpush1.bf16.msra.mxu0 %v666
    %686 = vmatprep.subr.bf16.mxu0 0
    %687 = vmatpush1.bf16.msra.mxu0 %v665
    %688 = vmatprep.subr.bf16.mxu0 0
    %689 = vmatpush1.bf16.msra.mxu0 %v664
    %690 = vmatprep.subr.bf16.mxu0 0
    %691 = vmatpush1.bf16.msra.mxu0 %v663
    %692 = vmatprep.subr.bf16.mxu0 0
    %693 = vmatpush1.bf16.msra.mxu0 %v662
    %694 = vmatprep.subr.bf16.mxu0 0
    %695 = vmatpush2.bf16.msra.mxu0 0
    %696 = vmatprep.subr.bf16.mxu0 0
    %697 = vmatpush2.bf16.msra.mxu0 0
    %698 = vmatprep.subr.bf16.mxu0 0
    %699 = vmatpush2.bf16.msra.mxu0 0
    %700 = vmatprep.subr.bf16.mxu0 0
    %701 = vmatpush2.bf16.msra.mxu0 0
    %702 = vmatprep.subr.bf16.mxu0 0
    %703 = vmatpush2.bf16.msra.mxu0 0
    %704 = vmatprep.subr.bf16.mxu0 0
    %705 = vmatpush2.bf16.msra.mxu0 0
    %706 = vmatprep.subr.bf16.mxu0 0
    %707 = vmatpush2.bf16.msra.mxu0 0
    %708 = vmatprep.subr.bf16.mxu0 0
    %709 = vmatpush2.bf16.msra.mxu0 0
    %710 = vmatprep.mubr.bf16.mxu0 0
    %711 = vmatmul.mubr.bf16.gmra.mxu0 %v606
    %v712 = vpop.f32.mrf.mxu0
    %v713 = vadd.f32 %v628, %v712
    %v714 = vpop.f32.mrf.mxu0
    %v715 = vpop.f32.mrf.mxu0
    %v716 = vpop.f32.mrf.mxu0
    %717 = vdwg.mxu0
    %v718 = vmax.f32 %v713, 0.0
    %v719 = vpack.c.bf16 %v718, %v718
    %v720 = vld [vmem:[#allocation11] sm:$0xf]
    %v721 = vld [vmem:[#allocation11 + $0x4] sm:$0xf]
    %v722 = vld [vmem:[#allocation11 + $0x8] sm:$0xf]
    %v723 = vld [vmem:[#allocation11 + $0xc] sm:$0xf]
    %v724 = vld [vmem:[#allocation11 + $0x10] sm:$0xf]
    %v725 = vld [vmem:[#allocation11 + $0x14] sm:$0xf]
    %v726 = vld [vmem:[#allocation11 + $0x18] sm:$0xf]
    %v727 = vld [vmem:[#allocation11 + $0x1c] sm:$0xf]
    %v728 = vld [vmem:[#allocation11 + $0x20] sm:$0xf]
    %v729 = vld [vmem:[#allocation11 + $0x24] sm:$0xf]
    %v730 = vld [vmem:[#allocation11 + $0x28] sm:$0xf]
    %v731 = vld [vmem:[#allocation11 + $0x2c] sm:$0xf]
    %v732 = vld [vmem:[#allocation11 + $0x30] sm:$0xf]
    %v733 = vld [vmem:[#allocation11 + $0x34] sm:$0xf]
    %v734 = vld [vmem:[#allocation11 + $0x38] sm:$0xf]
    %v735 = vld [vmem:[#allocation11 + $0x3c] sm:$0xf]
    %v736 = vld [vmem:[%s8] sm:$0x1]
    %v738 = vlaneseq
    %v739 = vshrl.u32 %v738, 7
    %v740 = vsub.s32 0, %v739
    %v741 = vrot.slane %v736, %v740
    %v759 = vunpack.c.l.b16 %v720
    %v760 = vunpack.c.l.b16 %v721
    %v761 = vunpack.c.l.b16 %v722
    %v762 = vunpack.c.l.b16 %v723
    %v763 = vunpack.c.l.b16 %v724
    %v764 = vunpack.c.l.b16 %v725
    %v765 = vunpack.c.l.b16 %v726
    %v766 = vunpack.c.l.b16 %v727
    %v767 = vunpack.c.l.b16 %v728
    %v768 = vunpack.c.l.b16 %v729
    %v769 = vunpack.c.l.b16 %v730
    %v770 = vunpack.c.l.b16 %v731
    %v771 = vunpack.c.l.b16 %v732
    %v772 = vunpack.c.l.b16 %v733
    %v773 = vunpack.c.l.b16 %v734
    %v774 = vunpack.c.l.b16 %v735
    %v775 = vpack.c.b16 %v760, %v759
    %v776 = vpack.c.b16 %v762, %v761
    %v777 = vpack.c.b16 %v764, %v763
    %v778 = vpack.c.b16 %v766, %v765
    %v779 = vpack.c.b16 %v768, %v767
    %v780 = vpack.c.b16 %v770, %v769
    %v781 = vpack.c.b16 %v772, %v771
    %v782 = vpack.c.b16 %v774, %v773
    %791 = vmatprep.subr.bf16.mxu0 0
    %792 = vmatpush1.bf16.msra.mxu0 %v782
    %793 = vmatprep.subr.bf16.mxu0 0
    %794 = vmatpush1.bf16.msra.mxu0 %v781
    %795 = vmatprep.subr.bf16.mxu0 0
    %796 = vmatpush1.bf16.msra.mxu0 %v780
    %797 = vmatprep.subr.bf16.mxu0 0
    %798 = vmatpush1.bf16.msra.mxu0 %v779
    %799 = vmatprep.subr.bf16.mxu0 0
    %800 = vmatpush1.bf16.msra.mxu0 %v778
    %801 = vmatprep.subr.bf16.mxu0 0
    %802 = vmatpush1.bf16.msra.mxu0 %v777
    %803 = vmatprep.subr.bf16.mxu0 0
    %804 = vmatpush1.bf16.msra.mxu0 %v776
    %805 = vmatprep.subr.bf16.mxu0 0
    %806 = vmatpush1.bf16.msra.mxu0 %v775
    %807 = vmatprep.subr.bf16.mxu0 0
    %808 = vmatpush2.bf16.msra.mxu0 0
    %809 = vmatprep.subr.bf16.mxu0 0
    %810 = vmatpush2.bf16.msra.mxu0 0
    %811 = vmatprep.subr.bf16.mxu0 0
    %812 = vmatpush2.bf16.msra.mxu0 0
    %813 = vmatprep.subr.bf16.mxu0 0
    %814 = vmatpush2.bf16.msra.mxu0 0
    %815 = vmatprep.subr.bf16.mxu0 0
    %816 = vmatpush2.bf16.msra.mxu0 0
    %817 = vmatprep.subr.bf16.mxu0 0
    %818 = vmatpush2.bf16.msra.mxu0 0
    %819 = vmatprep.subr.bf16.mxu0 0
    %820 = vmatpush2.bf16.msra.mxu0 0
    %821 = vmatprep.subr.bf16.mxu0 0
    %822 = vmatpush2.bf16.msra.mxu0 0
    %823 = vmatprep.mubr.bf16.mxu0 0
    %824 = vmatmul.mubr.bf16.gmra.mxu0 %v719
    %v825 = vpop.f32.mrf.mxu0
    %v826 = vadd.f32 %v741, %v825
    %v827 = vpop.f32.mrf.mxu0
    %v828 = vpop.f32.mrf.mxu0
    %v829 = vpop.f32.mrf.mxu0
    %830 = vdwg.mxu0
    %831 = vmax.xlane.f32.xlu0 %v826
    %v832 = vpop.xlane.xlu0 %831
    %v833 = vsub.f32 %v826, %v832
    %v834 = vmul.f32 %v833, 1.442695
    %v835 = vpow.pop %v834
    %836 = vadd.xlane.f32.xlu0 %v835
    %v837 = vpop.xlane.xlu0 %836
    %v838 = vrcp.pop %v837
    %v839 = vmul.f32 %v835, %v838
    %840 = vst [vmem:[#allocation13] sm:$0xff] %v839
    // Predicated region
    $region62: #{tpu_custom_call.1} parent=1 // pred_check
      _
    $region63: #{tpu_custom_call.1} parent=1 // pred_check_branch
      %842 = sbr.rel (0) target = $region65
    $region64: #{tpu_custom_call.1} parent=1 // pred_region
      %s844 = ssub.s32 128, 128
      %845 = vsyncadd [#allocation4], %s844
      %s847 = sshll.u32 [#allocation13], 4
      %s848 = int_to_ptr.vmem [resolvable:$true] %s847
      %850 = dma.vmem_to_hbm [thread:$0]  %s848, 128, %s9, [#allocation4]
    $region65: #{tpu_custom_call.1} parent=1 // pred_fallthru
      _
    // Predicated region
    $region66: #{tpu_custom_call.1} parent=1 // pred_check
      _
    $region67: #{tpu_custom_call.1} parent=1 // pred_check_branch
      %852 = sbr.rel (0) target = $region69
    $region68: #{tpu_custom_call.1} parent=1 // pred_region
      %853 = dma.done [#allocation4], 128
    $region69: #{tpu_custom_call.1} parent=1 // pred_fallthru
      _
    %854 = vsyncpa [#allocation3], 1
    %855 = vsyncpa [#allocation6], 1
    %856 = vsyncpa [#allocation9], 1
    %857 = vsyncpa [#allocation12], 1
    %858 = vsyncpa [#allocation4], 1

</llo_original>
